<compile_context>
chip_gen: v7x
topology: tpu7x:2x2x1
jax: 0.10.0
libtpu: 0.0.40
codegen_flags: <defaults>
</compile_context>

<pallas_src>
import jax
import jax.numpy as jnp
from jax import lax
from jax.experimental import pallas as pl
from jax.experimental.pallas import tpu as pltpu


# Conservative budgets that are safe on v5e/v6e (128 MiB VMEM) and v7x (64 MiB).
_VMEM_LIMIT_BYTES = 48 * 1024 * 1024
_FUSED_BYTES_BUDGET = 8 * 1024 * 1024     # single-shot fast-path threshold
_C_TILE_TARGET = 128                      # sublane dim target (multiple of 8)
_L_TILE_MAX = 4096                        # lane dim ceiling (multiple of 128)
_MAX_TILE_BYTES = 4 * 1024 * 1024         # per x-tile budget (before dbl-buf)


def _pick_tile(dim, base, target):
    """Largest multiple of `base` that divides `dim` and is <= target.

    Falls back to the full dimension when `dim` is not a multiple of `base`
    (a block dim equal to the full array dim is always legal on TPU).
    """
    if dim % base != 0:
        return dim
    best = base
    t = base
    limit = min(dim, max(target, base))
    while t <= limit:
        if dim % t == 0:
            best = t
        t += base
    return best


def _pick_tiles(C, L, itemsize):
    """Jointly pick (ct, lt) so one x tile stays under _MAX_TILE_BYTES."""
    ct = _pick_tile(C, 8, _C_TILE_TARGET)
    lt_target = _MAX_TILE_BYTES // max(ct * itemsize, 1)
    lt_target = max(128, min(_L_TILE_MAX, (lt_target // 128) * 128))
    lt = _pick_tile(L, 128, lt_target)
    return ct, lt


# --------------------------------------------------------------------------
# Kernels
# --------------------------------------------------------------------------
def _stats_kernel_masked(x_ref, m_ref, s_ref, ss_ref, cnt_ref):
    """Accumulate sum(x*m), sum((x*m)^2), sum(m) over the (B, L) grid axes."""
    @pl.when((pl.program_id(1) == 0) & (pl.program_id(2) == 0))
    def _init():
        s_ref[...] = jnp.zeros_like(s_ref)
        ss_ref[...] = jnp.zeros_like(ss_ref)
        cnt_ref[...] = jnp.zeros_like(cnt_ref)

    x = x_ref[...].astype(jnp.float32)            # (1, Ct, Lt)
    m = m_ref[...].astype(jnp.float32)            # (1, 1, Lt)
    xm = x * m
    s_ref[...] += jnp.sum(xm, axis=2, keepdims=True)        # (1, Ct, 1)
    ss_ref[...] += jnp.sum(xm * xm, axis=2, keepdims=True)   # (1, Ct, 1)
    # Valid count, replicated per channel row (kept fully in-kernel and
    # megacore-safe; each row of cnt ends up equal to the total count n).
    cnt_ref[...] += jnp.sum(m)


def _stats_kernel_nomask(x_ref, s_ref, ss_ref):
    """Accumulate sum(x), sum(x^2) over the (B, L) grid axes (no mask)."""
    @pl.when((pl.program_id(1) == 0) & (pl.program_id(2) == 0))
    def _init():
        s_ref[...] = jnp.zeros_like(s_ref)
        ss_ref[...] = jnp.zeros_like(ss_ref)

    x = x_ref[...].astype(jnp.float32)            # (1, Ct, Lt)
    s_ref[...] += jnp.sum(x, axis=2, keepdims=True)
    ss_ref[...] += jnp.sum(x * x, axis=2, keepdims=True)


def _apply_kernel_masked(x_ref, m_ref, scale_ref, shift_ref, out_ref):
    """out = (x*m) * scale + shift."""
    x = x_ref[...].astype(jnp.float32)            # (1, Ct, Lt)
    m = m_ref[...].astype(jnp.float32)            # (1, 1, Lt)
    out_ref[...] = (x * m * scale_ref[...] + shift_ref[...]).astype(out_ref.dtype)


def _apply_kernel_nomask(x_ref, scale_ref, shift_ref, out_ref):
    """out = x * scale + shift   (one FMA per element)."""
    x = x_ref[...].astype(jnp.float32)            # (1, Ct, Lt)
    out_ref[...] = (x * scale_ref[...] + shift_ref[...]).astype(out_ref.dtype)


def _make_fused_kernel(eps, affine, has_mask, n_static):
    """Single-shot kernel for small problems (reads x from HBM only once)."""
    def kernel(*refs):
        if has_mask:
            x_ref, m_ref, w_ref, b_ref, out_ref, mean_ref, var_ref = refs
        else:
            x_ref, w_ref, b_ref, out_ref, mean_ref, var_ref = refs
        x = x_ref[...].astype(jnp.float32)        # (B, C, L)
        if has_mask:
            m = m_ref[...].astype(jnp.float32)    # (B, 1, L)
            xm = x * m
            # NOTE: like the torch module, an all-zero mask yields inf/nan here.
            inv_n = 1.0 / jnp.sum(m)
        else:
            xm = x
            inv_n = jnp.float32(1.0 / n_static)
        s = jnp.sum(jnp.sum(xm, axis=2, keepdims=True), axis=0, keepdims=True)
        mean = s * inv_n                          # (1, C, 1)
        diff = xm - mean                          # reused for var AND the output
        var = jnp.sum(jnp.sum(diff * diff, axis=2, keepdims=True),
                      axis=0, keepdims=True) * inv_n
        inv_std = lax.rsqrt(var + eps)            # EUP rsqrt, no per-element divide
        if affine:
            scale = w_ref[...].astype(jnp.float32)[None] * inv_std   # (1, C, 1)
            out = diff * scale + b_ref[...].astype(jnp.float32)[None]
        else:
            out = diff * inv_std
        out_ref[...] = out.astype(out_ref.dtype)
        mean_ref[...] = mean
        var_ref[...] = var
    return kernel


# --------------------------------------------------------------------------
# pallas_call wrappers
# --------------------------------------------------------------------------
def _stats_pass(x, mask, ct, lt):
    B, C, L = x.shape
    grid = (C // ct, B, L // lt)                  # reduction axes (B, L) last
    stat_out_spec = pl.BlockSpec((1, ct, 1), lambda ci, bi, li: (0, ci, 0))
    x_spec = pl.BlockSpec((1, ct, lt), lambda ci, bi, li: (bi, ci, li))
    cp = pltpu.CompilerParams(
        dimension_semantics=("parallel", "arbitrary", "arbitrary"),
        vmem_limit_bytes=_VMEM_LIMIT_BYTES)
    if mask is not None:
        m_spec = pl.BlockSpec((1, 1, lt), lambda ci, bi, li: (bi, 0, li))
        return pl.pallas_call(
            _stats_kernel_masked,
            out_shape=(jax.ShapeDtypeStruct((1, C, 1), jnp.float32),) * 3,
            grid=grid,
            in_specs=[x_spec, m_spec],
            out_specs=(stat_out_spec,) * 3,
            compiler_params=cp,
        )(x, mask)
    return pl.pallas_call(
        _stats_kernel_nomask,
        out_shape=(jax.ShapeDtypeStruct((1, C, 1), jnp.float32),) * 2,
        grid=grid,
        in_specs=[x_spec],
        out_specs=(stat_out_spec,) * 2,
        compiler_params=cp,
    )(x)


def _apply_pass(x, mask, scale, shift, ct, lt):
    B, C, L = x.shape
    grid = (B, L // lt, C // ct)                  # C innermost: mask tile reused
    x_spec = pl.BlockSpec((1, ct, lt), lambda bi, li, ci: (bi, ci, li))
    out_spec = pl.BlockSpec((1, ct, lt), lambda bi, li, ci: (bi, ci, li))
    stat_in_spec = pl.BlockSpec((1, ct, 1), lambda bi, li, ci: (0, ci, 0))
    cp = pltpu.CompilerParams(
        dimension_semantics=("parallel", "parallel", "parallel"),
        vmem_limit_bytes=_VMEM_LIMIT_BYTES)
    if mask is not None:
        m_spec = pl.BlockSpec((1, 1, lt), lambda bi, li, ci: (bi, 0, li))
        return pl.pallas_call(
            _apply_kernel_masked,
            out_shape=jax.ShapeDtypeStruct((B, C, L), x.dtype),
            grid=grid,
            in_specs=[x_spec, m_spec, stat_in_spec, stat_in_spec],
            out_specs=out_spec,
            compiler_params=cp,
        )(x, mask, scale, shift)
    return pl.pallas_call(
        _apply_kernel_nomask,
        out_shape=jax.ShapeDtypeStruct((B, C, L), x.dtype),
        grid=grid,
        in_specs=[x_spec, stat_in_spec, stat_in_spec],
        out_specs=out_spec,
        compiler_params=cp,
    )(x, scale, shift)


def _fused_pass(x, mask, w, b, eps, affine):
    B, C, L = x.shape
    vmem = pl.BlockSpec(memory_space=pltpu.MemorySpace.VMEM)
    has_mask = mask is not None
    kernel = _make_fused_kernel(eps, affine, has_mask, float(B * L))
    args = (x, mask, w, b) if has_mask else (x, w, b)
    return pl.pallas_call(
        kernel,
        out_shape=(jax.ShapeDtypeStruct((B, C, L), x.dtype),
                   jax.ShapeDtypeStruct((1, C, 1), jnp.float32),
                   jax.ShapeDtypeStruct((1, C, 1), jnp.float32)),
        in_specs=[vmem] * len(args),
        out_specs=(vmem, vmem, vmem),
        compiler_params=pltpu.CompilerParams(vmem_limit_bytes=_VMEM_LIMIT_BYTES),
    )(*args)


# --------------------------------------------------------------------------
# Public forward (matches MaskedBatchNorm1d.forward)
# --------------------------------------------------------------------------
def masked_batch_norm_1d(x, input_mask, weight, bias,
                         running_mean, running_var, num_batches_tracked,
                         *, eps=1e-5, momentum=0.1, affine=True,
                         track_running_stats=True, training=True,
                         force_path=None):
    """Forward pass matching MaskedBatchNorm1d.forward.

    Returns (output, new_running_mean, new_running_var, new_num_batches_tracked).
    `force_path` in {None, "fused", "tiled"} selects the batch-stats
    implementation (None = size-based auto dispatch).
    """
    B, C, L = x.shape
    if input_mask is not None and input_mask.shape != (B, 1, L):
        raise ValueError("Mask should have shape (B, 1, L).")

    use_batch_stats = training or (not track_running_stats)

    w_f32 = (weight if (affine and weight is not None)
             else jnp.ones((C, 1), jnp.float32)).astype(jnp.float32)
    b_f32 = (bias if (affine and bias is not None)
             else jnp.zeros((C, 1), jnp.float32)).astype(jnp.float32)

    itemsize = jnp.dtype(x.dtype).itemsize
    ct, lt = _pick_tiles(C, L, itemsize)

    cur_mean = cur_var = None
    if use_batch_stats:
        # Single-shot footprint estimate: x-in + out + ~3 f32 temporaries + mask.
        fused_bytes = B * C * L * (2 * itemsize + 12)
        if input_mask is not None:
            fused_bytes += B * L * itemsize
        use_fused = fused_bytes <= _FUSED_BYTES_BUDGET
        if force_path == "fused":
            use_fused = True
        elif force_path == "tiled":
            use_fused = False

        if use_fused:
            out, cur_mean, cur_var = _fused_pass(x, input_mask, w_f32, b_f32,
                                                 eps, affine)
        else:
            if input_mask is not None:
                s_xm, s_xxm, cnt = _stats_pass(x, input_mask, ct, lt)
                # NOTE: like torch, an all-zero mask yields inf/nan here.
                n = cnt[0, 0, 0]
            else:
                s_xm, s_xxm = _stats_pass(x, None, ct, lt)
                n = jnp.float32(B * L)
            inv_n = 1.0 / n
            cur_mean = s_xm * inv_n
            # sum over ALL B*L positions of (x*m - mean)^2 via the
            # sum-of-squares identity (masked positions contribute mean^2 each,
            # exactly as in the torch module), divided by the valid count n.
            cur_var = (s_xxm - 2.0 * cur_mean * s_xm
                       + float(B * L) * cur_mean * cur_mean) * inv_n
            inv_std = lax.rsqrt(cur_var + eps)
            if affine:
                scale = w_f32[None] * inv_std                 # (1, C, 1)
                shift = b_f32[None] - cur_mean * scale
            else:
                scale = inv_std
                shift = -cur_mean * scale
            out = _apply_pass(x, input_mask, scale, shift, ct, lt)
    else:
        # Eval with tracked running stats: batch statistics are dead work in the
        # torch code, so only the apply pass runs here (one read of x, one write).
        rm = running_mean.astype(jnp.float32).reshape(1, C, 1)
        rv = running_var.astype(jnp.float32).reshape(1, C, 1)
        inv_std = lax.rsqrt(rv + eps)
        if affine:
            scale = w_f32[None] * inv_std
            shift = b_f32[None] - rm * scale
        else:
            scale = inv_std
            shift = -rm * scale
        out = _apply_pass(x, input_mask, scale, shift, ct, lt)

    # Running-stat bookkeeping (tiny (1, C, 1) elementwise glue, matches torch).
    new_rm, new_rv, new_nbt = running_mean, running_var, num_batches_tracked
    if track_running_stats and training:
        rm0 = running_mean.astype(jnp.float32).reshape(1, C, 1)
        rv0 = running_var.astype(jnp.float32).reshape(1, C, 1)
        is_first = (num_batches_tracked == 0)
        new_rm = jnp.where(is_first, cur_mean,
                           (1.0 - momentum) * rm0 + momentum * cur_mean)
        new_rv = jnp.where(is_first, cur_var,
                           (1.0 - momentum) * rv0 + momentum * cur_var)
        new_nbt = num_batches_tracked + 1

    return out, new_rm, new_rv, new_nbt


# --------------------------------------------------------------------------
# Pure-JAX references (for verification)
# --------------------------------------------------------------------------
def _reference_train(x, mask, weight, bias, eps):
    masked = x * mask
    n = jnp.sum(mask)
    s = jnp.sum(jnp.sum(masked, axis=0, keepdims=True), axis=2, keepdims=True)
    mean = s / n
    var = jnp.sum(jnp.sum((masked - mean) ** 2, axis=0, keepdims=True),
                  axis=2, keepdims=True) / n
    normed = (masked - mean) / jnp.sqrt(var + eps)
    return normed * weight[None] + bias[None], mean, var


def _reference_eval(x, mask, weight, bias, running_mean, running_var, eps):
    masked = x * mask
    normed = (masked - running_mean) / jnp.sqrt(running_var + eps)
    return normed * weight[None] + bias[None]


if __name__ == "__main__":
    eps = 1e-5
    momentum = 0.1
    key = jax.random.PRNGKey(0)

    def make_inputs(k, B, C, L):
        kx, km = jax.random.split(k)
        x = jax.random.normal(kx, (B, C, L), dtype=jnp.float32)
        mask = (jax.random.uniform(km, (B, 1, L)) > 0.3).astype(jnp.float32)
        weight = jnp.full((C, 1), 1.5, jnp.float32)
        bias = jnp.full((C, 1), 0.25, jnp.float32)
        running_mean = jnp.zeros((1, C, 1), jnp.float32)
        running_var = jnp.ones((1, C, 1), jnp.float32)
        nbt = jnp.array(0, jnp.int32)
        return x, mask, weight, bias, running_mean, running_var, nbt

    k1, k2 = jax.random.split(key)

    # 1) Small problem, training, auto dispatch (fused single-shot path).
    B, C, L = 2, 4, 16
    x, mask, w, b, rm, rv, nbt = make_inputs(k1, B, C, L)
    out, new_rm, new_rv, new_nbt = masked_batch_norm_1d(
        x, mask, w, b, rm, rv, nbt, eps=eps, momentum=momentum,
        affine=True, track_running_stats=True, training=True)
    jax.block_until_ready(out)
    ref, ref_mean, ref_var = _reference_train(x, mask, w, b, eps)
    assert out.shape == (B, C, L)
    assert jnp.allclose(out, ref, atol=1e-5, rtol=1e-5), "fused path mismatch"
    assert jnp.allclose(new_rm, ref_mean, atol=1e-5, rtol=1e-5)
    assert jnp.allclose(new_rv, ref_var, atol=1e-5, rtol=1e-5)
    assert int(new_nbt) == 1

    # 2) Same small problem through the tiled two-pass path.
    out_t, _, _, _ = masked_batch_norm_1d(
        x, mask, w, b, rm, rv, nbt, eps=eps, momentum=momentum,
        affine=True, track_running_stats=True, training=True, force_path="tiled")
    jax.block_until_ready(out_t)
    assert jnp.allclose(out_t, ref, atol=1e-5, rtol=1e-5), "tiled path mismatch"

    # 3) Larger problem exercising real C/L tiling and the reduction grid.
    B2, C2, L2 = 2, 16, 4096
    x2, mask2, w2, b2, rm2, rv2, nbt2 = make_inputs(k2, B2, C2, L2)
    out2, rm2_new, rv2_new, _ = masked_batch_norm_1d(
        x2, mask2, w2, b2, rm2, rv2, nbt2, eps=eps, momentum=momentum,
        affine=True, track_running_stats=True, training=True, force_path="tiled")
    jax.block_until_ready(out2)
    ref2, ref2_mean, ref2_var = _reference_train(x2, mask2, w2, b2, eps)
    assert jnp.allclose(out2, ref2, atol=1e-4, rtol=1e-4), "tiled (large) mismatch"
    assert jnp.allclose(rm2_new, ref2_mean, atol=1e-4, rtol=1e-4)
    assert jnp.allclose(rv2_new, ref2_var, atol=1e-4, rtol=1e-4)

    # 4) Eval mode with tracked running stats (apply-only path, stats skipped).
    out_e, rm_e, rv_e, nbt_e = masked_batch_norm_1d(
        x, mask, w, b, new_rm, new_rv, new_nbt, eps=eps, momentum=momentum,
        affine=True, track_running_stats=True, training=False)
    jax.block_until_ready(out_e)
    ref_e = _reference_eval(x, mask, w, b, new_rm, new_rv, eps)
    assert jnp.allclose(out_e, ref_e, atol=1e-5, rtol=1e-5), "eval path mismatch"
    assert jnp.allclose(rm_e, new_rm) and jnp.allclose(rv_e, new_rv)
    assert int(nbt_e) == int(new_nbt)

    # 5) No-mask path (input_mask=None): mask-free kernels, n = B*L.
    ones_mask2 = jnp.ones((B2, 1, L2), jnp.float32)
    out_nm, rm_nm, rv_nm, _ = masked_batch_norm_1d(
        x2, None, w2, b2, rm2, rv2, nbt2, eps=eps, momentum=momentum,
        affine=True, track_running_stats=True, training=True, force_path="tiled")
    jax.block_until_ready(out_nm)
    ref_nm, ref_nm_mean, ref_nm_var = _reference_train(x2, ones_mask2, w2, b2, eps)
    assert jnp.allclose(out_nm, ref_nm, atol=1e-4, rtol=1e-4), "no-mask mismatch"
    assert jnp.allclose(rm_nm, ref_nm_mean, atol=1e-4, rtol=1e-4)
    assert jnp.allclose(rv_nm, ref_nm_var, atol=1e-4, rtol=1e-4)

    print("KERNEL_OK")
</pallas_src>

<mosaic_0001>
module attributes {stable_mosaic.version = 11 : i64} {
  func.func @kernel(%arg0: memref<2x4x16xf32, #tpu.memory_space<vmem>>, %arg1: memref<2x1x16xf32, #tpu.memory_space<vmem>>, %arg2: memref<4x1xf32, #tpu.memory_space<vmem>>, %arg3: memref<4x1xf32, #tpu.memory_space<vmem>>, %arg4: memref<2x4x16xf32, #tpu.memory_space<vmem>>, %arg5: memref<1x4x1xf32, #tpu.memory_space<vmem>>, %arg6: memref<1x4x1xf32, #tpu.memory_space<vmem>>) attributes {dimension_semantics = [], scalar_prefetch = 0 : i64, scratch_operands = 0 : i64, tpu.core_type = #tpu.core_type<tc>} {
    %c0 = arith.constant 0 : index
    %c0_0 = arith.constant 0 : index
    %c0_1 = arith.constant 0 : index
    %0 = vector.load %arg0[%c0, %c0_0, %c0_1] : memref<2x4x16xf32, #tpu.memory_space<vmem>>, vector<2x4x16xf32>
    %c0_2 = arith.constant 0 : index
    %c0_3 = arith.constant 0 : index
    %c0_4 = arith.constant 0 : index
    %1 = vector.load %arg1[%c0_2, %c0_3, %c0_4] : memref<2x1x16xf32, #tpu.memory_space<vmem>>, vector<2x1x16xf32>
    %2 = vector.broadcast %1 : vector<2x1x16xf32> to vector<2x4x16xf32>
    %3 = arith.mulf %0, %2 : vector<2x4x16xf32>
    %4 = vector.shape_cast %1 : vector<2x1x16xf32> to vector<1x2x1x16xf32>
    %cst = arith.constant dense<0.000000e+00> : vector<1xf32>
    %5 = vector.multi_reduction <add>, %4, %cst [1, 2, 3] : vector<1x2x1x16xf32> to vector<1xf32>
    %6 = vector.shape_cast %5 : vector<1xf32> to vector<1x1x1x1xf32>
    %7 = vector.extract %6[0, 0, 0, 0] : f32 from vector<1x1x1x1xf32>
    %cst_5 = arith.constant 1.000000e+00 : f32
    %8 = arith.divf %cst_5, %7 : f32
    %cst_6 = arith.constant dense<0.000000e+00> : vector<2x4xf32>
    %9 = vector.multi_reduction <add>, %3, %cst_6 [2] : vector<2x4x16xf32> to vector<2x4xf32>
    %10 = vector.shape_cast %9 : vector<2x4xf32> to vector<2x4x1xf32>
    %cst_7 = arith.constant dense<0.000000e+00> : vector<4x1xf32>
    %11 = vector.multi_reduction <add>, %10, %cst_7 [0] : vector<2x4x1xf32> to vector<4x1xf32>
    %12 = vector.shape_cast %11 : vector<4x1xf32> to vector<1x4x1xf32>
    %13 = vector.broadcast %8 : f32 to vector<1x4x1xf32>
    %14 = arith.mulf %12, %13 : vector<1x4x1xf32>
    %15 = vector.broadcast %14 : vector<1x4x1xf32> to vector<2x4x16xf32>
    %16 = arith.subf %3, %15 : vector<2x4x16xf32>
    %17 = arith.mulf %16, %16 : vector<2x4x16xf32>
    %cst_8 = arith.constant dense<0.000000e+00> : vector<2x4xf32>
    %18 = vector.multi_reduction <add>, %17, %cst_8 [2] : vector<2x4x16xf32> to vector<2x4xf32>
    %19 = vector.shape_cast %18 : vector<2x4xf32> to vector<2x4x1xf32>
    %cst_9 = arith.constant dense<0.000000e+00> : vector<4x1xf32>
    %20 = vector.multi_reduction <add>, %19, %cst_9 [0] : vector<2x4x1xf32> to vector<4x1xf32>
    %21 = vector.shape_cast %20 : vector<4x1xf32> to vector<1x4x1xf32>
    %22 = vector.broadcast %8 : f32 to vector<1x4x1xf32>
    %23 = arith.mulf %21, %22 : vector<1x4x1xf32>
    %cst_10 = arith.constant 9.99999974E-6 : f32
    %24 = vector.broadcast %cst_10 : f32 to vector<1x4x1xf32>
    %25 = arith.addf %23, %24 : vector<1x4x1xf32>
    %26 = math.rsqrt %25 : vector<1x4x1xf32>
    %c0_11 = arith.constant 0 : index
    %c0_12 = arith.constant 0 : index
    %27 = vector.load %arg2[%c0_11, %c0_12] : memref<4x1xf32, #tpu.memory_space<vmem>>, vector<4x1xf32>
    %28 = vector.shape_cast %27 : vector<4x1xf32> to vector<1x4x1xf32>
    %29 = arith.mulf %28, %26 : vector<1x4x1xf32>
    %30 = vector.broadcast %29 : vector<1x4x1xf32> to vector<2x4x16xf32>
    %31 = arith.mulf %16, %30 : vector<2x4x16xf32>
    %c0_13 = arith.constant 0 : index
    %c0_14 = arith.constant 0 : index
    %32 = vector.load %arg3[%c0_13, %c0_14] : memref<4x1xf32, #tpu.memory_space<vmem>>, vector<4x1xf32>
    %33 = vector.shape_cast %32 : vector<4x1xf32> to vector<1x4x1xf32>
    %34 = vector.broadcast %33 : vector<1x4x1xf32> to vector<2x4x16xf32>
    %35 = arith.addf %31, %34 : vector<2x4x16xf32>
    %c0_15 = arith.constant 0 : index
    %c0_16 = arith.constant 0 : index
    %c0_17 = arith.constant 0 : index
    %36 = vector.load %arg4[%c0_15, %c0_16, %c0_17] : memref<2x4x16xf32, #tpu.memory_space<vmem>>, vector<2x4x16xf32>
    tpu.vector_store %arg4[%c0_15, %c0_16, %c0_17], %35 {strides = array<i32>} : memref<2x4x16xf32, #tpu.memory_space<vmem>>, vector<2x4x16xf32>,
    %c0_18 = arith.constant 0 : index
    %c0_19 = arith.constant 0 : index
    %c0_20 = arith.constant 0 : index
    %37 = vector.load %arg5[%c0_18, %c0_19, %c0_20] : memref<1x4x1xf32, #tpu.memory_space<vmem>>, vector<1x4x1xf32>
    tpu.vector_store %arg5[%c0_18, %c0_19, %c0_20], %14 {strides = array<i32>} : memref<1x4x1xf32, #tpu.memory_space<vmem>>, vector<1x4x1xf32>,
    %c0_21 = arith.constant 0 : index
    %c0_22 = arith.constant 0 : index
    %c0_23 = arith.constant 0 : index
    %38 = vector.load %arg6[%c0_21, %c0_22, %c0_23] : memref<1x4x1xf32, #tpu.memory_space<vmem>>, vector<1x4x1xf32>
    tpu.vector_store %arg6[%c0_21, %c0_22, %c0_23], %23 {strides = array<i32>} : memref<1x4x1xf32, #tpu.memory_space<vmem>>, vector<1x4x1xf32>,
    return
  }
}

</mosaic_0001>

<llo_original>
// kernel: tpu_custom_call.1
$region0: #{tpu_custom_call.1}
  #allocation0 [shape = 'u32[]', space=smem, size = 0x4, offset = 0x4, fixed_abs, tag = 'smem constant byte address 0x4 - core index']
  #allocation1 [shape = 'u32[144,128]{1,0:T(1,128)}', space=vmem, size = 0x12000, scoped, tag = 'internal scratch']
  %s0 = inlined_call_operand.vmem [shape: f32[2,4,16], index: 0, kind: input, shape index: {}]
  %s1 = inlined_call_operand.vmem [shape: f32[2,1,16], index: 1, kind: input, shape index: {}]
  %s2 = inlined_call_operand.vmem [shape: f32[4,1], index: 2, kind: input, shape index: {}]
  %s3 = inlined_call_operand.vmem [shape: f32[4,1], index: 3, kind: input, shape index: {}]
  %s4 = inlined_call_operand.hbm [shape: f32[2,4,16], index: 4, kind: output, shape index: {0}]
  %s5 = inlined_call_operand.vmem [shape: f32[1,4,1], index: 5, kind: output, shape index: {1}]
  %s6 = inlined_call_operand.vmem [shape: f32[1,4,1], index: 6, kind: output, shape index: {2}]
  %7 = xla_tuple %s4, %s5, %s6
  %s8 = sld [smem:[#allocation0]]
  $region42: #{tpu_custom_call.1} parent=0
    _
  %s10 = ssub.s32 1, %s8
  %s11 = scalar_select 0, %s10, %s8
  $region1: #{tpu_custom_call.1} parent=0
    #allocation2 [shape = 'u8[4096]{0}', space=vmem, size = 0x1000, scoped, tag = 'output window, operand 0, single buffered']
    #allocation3 [shape = 's32[1]{0}', space=sflag, size = 0x4, scoped, tag = 'scoped memory for tpu_custom_call.1']
    %12 = vsyncpa [#allocation3], 0
    // Predicated region
    $region2: #{tpu_custom_call.1} parent=1 // pred_check
      _
    $region3: #{tpu_custom_call.1} parent=1 // pred_check_branch
      %14 = sbr.rel (0) target = $region5
    $region4: #{tpu_custom_call.1} parent=1 // pred_region
      _
    $region5: #{tpu_custom_call.1} parent=1 // pred_fallthru
      _
    // Predicated region
    $region6: #{tpu_custom_call.1} parent=1 // pred_check
      _
    $region7: #{tpu_custom_call.1} parent=1 // pred_check_branch
      %16 = sbr.rel (0) target = $region9
    $region8: #{tpu_custom_call.1} parent=1 // pred_region
      _
    $region9: #{tpu_custom_call.1} parent=1 // pred_fallthru
      _
    // Predicated region
    $region10: #{tpu_custom_call.1} parent=1 // pred_check
      _
    $region11: #{tpu_custom_call.1} parent=1 // pred_check_branch
      %18 = sbr.rel (0) target = $region13
    $region12: #{tpu_custom_call.1} parent=1 // pred_region
      _
    $region13: #{tpu_custom_call.1} parent=1 // pred_fallthru
      _
    // Predicated region
    $region14: #{tpu_custom_call.1} parent=1 // pred_check
      _
    $region15: #{tpu_custom_call.1} parent=1 // pred_check_branch
      %20 = sbr.rel (0) target = $region17
    $region16: #{tpu_custom_call.1} parent=1 // pred_region
      _
    $region17: #{tpu_custom_call.1} parent=1 // pred_fallthru
      _
    %v21 = vld [vmem:[%s0] sm:$0xf]
    %v22 = vld [vmem:[%s0 + $0x4] sm:$0xf]
    %v23 = vld [vmem:[%s1] sm:$0x1]
    %v24 = vld [vmem:[%s1 + $0x1] sm:$0x1]
    %v27 = vlaneseq
    %v28 = vshrl.u32 %v27, 7
    %v29 = vsub.s32 0, %v28
    %v30 = vrot.slane %v23, %v29
    %v31 = vlaneseq
    %v32 = vshrl.u32 %v31, 7
    %v33 = vsub.s32 0, %v32
    %v34 = vrot.slane %v24, %v33
    %v37 = vmul.f32 %v21, %v30
    %v38 = vmul.f32 %v22, %v34
    %vm39 = vcmask 122880
    %v40 = vsel %vm39, %v23, 0.0
    %v41 = vsel %vm39, %v24, 0.0
    %v42 = vadd.f32 %v40, %v41
    %43 = vadd.xlane.f32.xlu0 %v42
    %v44 = vpop.xlane.xlu0 %43
    %v45 = vrot.slane %v44, 4
    %v46 = vadd.f32 %v44, %v45
    %v47 = vrot.slane %v46, 2
    %v48 = vadd.f32 %v46, %v47
    %v49 = vrot.slane %v48, 1
    %v50 = vadd.f32 %v48, %v49
    %s51 = vtos %v50
    %v52 = vstv %s51
    %v53 = vrcp.pop %v52
    %s54 = vtos %v53
    %vm55 = vcmask 125952
    %v56 = vsel %vm55, %v37, 0.0
    %57 = vadd.xlane.f32.xlu0 %v56
    %v58 = vpop.xlane.xlu0 %57
    %v59 = vsel %vm55, %v38, 0.0
    %60 = vadd.xlane.f32.xlu0 %v59
    %v61 = vpop.xlane.xlu0 %60
    %vm62 = vcmask 1043456
    %v63 = vsel %vm62, %v58, 0.0
    %v64 = vsel %vm62, %v61, 0.0
    %v65 = vadd.f32 %v63, %v64
    %v66 = vstv %s54
    %v67 = vmul.f32 %v65, %v66
    %v68 = vsub.f32 %v37, %v67
    %v69 = vsub.f32 %v38, %v67
    %v70 = vmul.f32 %v68, %v68
    %v71 = vmul.f32 %v69, %v69
    %v72 = vsel %vm55, %v70, 0.0
    %73 = vadd.xlane.f32.xlu0 %v72
    %v74 = vpop.xlane.xlu0 %73
    %v75 = vsel %vm55, %v71, 0.0
    %76 = vadd.xlane.f32.xlu0 %v75
    %v77 = vpop.xlane.xlu0 %76
    %v78 = vsel %vm62, %v74, 0.0
    %v79 = vsel %vm62, %v77, 0.0
    %v80 = vadd.f32 %v78, %v79
    %v81 = vmul.f32 %v80, %v66
    %v82 = vadd.f32 %v81, 1e-05
    %v83 = vrsqrt.pop %v82
    %v84 = vld [vmem:[%s2] sm:$0xf]
    %v85 = vmul.f32 %v84, %v83
    %87 = vset.pattern.permute.xlu0 0
    %88 = vperm.xlu0 %87, %v85
    %v89 = vpop.permute.xlu0 %88
    %v91 = vmul.f32 %v68, %v89
    %v92 = vmul.f32 %v69, %v89
    %v93 = vld [vmem:[%s3] sm:$0xf]
    %95 = vset.pattern.permute.xlu0 0
    %96 = vperm.xlu0 %95, %v93
    %v97 = vpop.permute.xlu0 %96
    %v99 = vadd.f32 %v91, %v97
    %v100 = vadd.f32 %v92, %v97
    %101 = vst.msk [vmem:[#allocation2] sm:$0xf] %vm55, %v99
    %102 = vst.msk [vmem:[#allocation2 + $0x4] sm:$0xf] %vm55, %v100
    %vm103 = vcmask 3072
    %104 = vst.msk [vmem:[%s5] sm:$0xf] %vm103, %v67
    %105 = vst.msk [vmem:[%s6] sm:$0xf] %vm103, %v81
    // Predicated region
    $region18: #{tpu_custom_call.1} parent=1 // pred_check
      _
    $region19: #{tpu_custom_call.1} parent=1 // pred_check_branch
      %107 = sbr.rel (0) target = $region21
    $region20: #{tpu_custom_call.1} parent=1 // pred_region
      %s109 = ssub.s32 128, 128
      %110 = vsyncadd [#allocation3], %s109
      %s111 = sshll.u32 [#allocation2], 4
      %s112 = int_to_ptr.vmem [resolvable:$true] %s111
      %117 = dma.vmem_to_hbm [thread:$0]  %s112, 128, %s4, [#allocation3], 64, 64, 4
    $region21: #{tpu_custom_call.1} parent=1 // pred_fallthru
      _
    // Predicated region
    $region22: #{tpu_custom_call.1} parent=1 // pred_check
      _
    $region23: #{tpu_custom_call.1} parent=1 // pred_check_branch
      %119 = sbr.rel (0) target = $region25
    $region24: #{tpu_custom_call.1} parent=1 // pred_region
      _
    $region25: #{tpu_custom_call.1} parent=1 // pred_fallthru
      _
    // Predicated region
    $region26: #{tpu_custom_call.1} parent=1 // pred_check
      _
    $region27: #{tpu_custom_call.1} parent=1 // pred_check_branch
      %121 = sbr.rel (0) target = $region29
    $region28: #{tpu_custom_call.1} parent=1 // pred_region
      _
    $region29: #{tpu_custom_call.1} parent=1 // pred_fallthru
      _
    // Predicated region
    $region30: #{tpu_custom_call.1} parent=1 // pred_check
      _
    $region31: #{tpu_custom_call.1} parent=1 // pred_check_branch
      %123 = sbr.rel (0) target = $region33
    $region32: #{tpu_custom_call.1} parent=1 // pred_region
      %124 = dma.done [#allocation3], 128
    $region33: #{tpu_custom_call.1} parent=1 // pred_fallthru
      _
    // Predicated region
    $region34: #{tpu_custom_call.1} parent=1 // pred_check
      _
    $region35: #{tpu_custom_call.1} parent=1 // pred_check_branch
      %126 = sbr.rel (0) target = $region37
    $region36: #{tpu_custom_call.1} parent=1 // pred_region
      _
    $region37: #{tpu_custom_call.1} parent=1 // pred_fallthru
      _
    // Predicated region
    $region38: #{tpu_custom_call.1} parent=1 // pred_check
      _
    $region39: #{tpu_custom_call.1} parent=1 // pred_check_branch
      %128 = sbr.rel (0) target = $region41
    $region40: #{tpu_custom_call.1} parent=1 // pred_region
      _
    $region41: #{tpu_custom_call.1} parent=1 // pred_fallthru
      _
    %129 = vsyncpa [#allocation3], 1

</llo_original>
